<compile_context>
chip_gen: v6e
topology: v6e:2x2x1
jax: 0.10.0
libtpu: 0.0.40
codegen_flags: <defaults>
</compile_context>

<pallas_src>
import math

import jax
import jax.numpy as jnp
from jax.experimental import pallas as pl
from jax.experimental.pallas import tpu as pltpu


def make_positional_encoding_table(d_model: int, max_len: int = 5000):
    """Deterministic pe buffer, shape (max_len, 1, d_model), float32 — same formula as PyTorch."""
    position = jnp.arange(max_len, dtype=jnp.float32)[:, None]            # (max_len, 1)
    div_term = jnp.exp(
        jnp.arange(0, d_model, 2, dtype=jnp.float32) * (-math.log(10000.0) / d_model)
    )                                                                      # (d_model//2,)
    pe = jnp.zeros((max_len, d_model), dtype=jnp.float32)
    pe = pe.at[:, 0::2].set(jnp.sin(position * div_term))
    pe = pe.at[:, 1::2].set(jnp.cos(position * div_term))
    return pe[:, None, :]                                                  # (max_len, 1, d_model)


def _pe_add_kernel(x_ref, pe_ref, o_ref):
    # x_ref/o_ref: (tS, B, D) tiles in the native layout; pe_ref: (tS, 1, D) float32.
    # The (tS, 1, D) + (tS, B, D) broadcast over the batch axis is a VPU sublane
    # broadcast; the add runs in f32 and the store casts back to the output dtype.
    o_ref[...] = (x_ref[...] + pe_ref[...]).astype(o_ref.dtype)


def _sublane_pack(itemsize: int) -> int:
    # Native sublane packing per dtype width: 8 rows (f32), 16 (bf16/f16), 32 (int8/fp8).
    return {4: 8, 2: 16, 1: 32}.get(itemsize, 8)


def _pick_seq_tile(S: int, B: int, D: int, itemsize: int, vmem_tile_budget_bytes: int) -> int:
    """Largest seq tile (multiple of the dtype's sublane packing) whose double-buffered
    working set (x-in + out tiles in x.dtype, pe-in tile in f32) fits the budget."""
    pack = _sublane_pack(itemsize)
    per_row = 2 * (2 * B * D * itemsize + D * 4)     # 2x double-buffer, per seq row
    t = (vmem_tile_budget_bytes // per_row) // pack * pack
    t = max(pack, min(t, 4096))
    if S <= t:
        return S          # full seq in one block (legal: block dim equals full array dim)
    return t


def positional_encoding_forward(x, pe, *, vmem_tile_budget_bytes=4 * 1024 * 1024):
    """x: (S, B, D); pe: (max_len, 1, D) float32. Returns x + pe[:S] (broadcast over B), in x.dtype."""
    S, B, D = x.shape
    max_len = pe.shape[0]
    if S > max_len:
        raise ValueError(f"seq_len {S} exceeds max_len {max_len} of positional table")

    itemsize = jnp.dtype(x.dtype).itemsize
    tS = _pick_seq_tile(S, B, D, itemsize, vmem_tile_budget_bytes)
    grid = (pl.cdiv(S, tS),)   # seq tiles only; batch folded into the block

    cost = pl.CostEstimate(
        flops=S * B * D,
        transcendentals=0,
        bytes_accessed=2 * S * B * D * itemsize + S * D * 4,
    )

    return pl.pallas_call(
        _pe_add_kernel,
        out_shape=jax.ShapeDtypeStruct((S, B, D), x.dtype),
        grid=grid,
        in_specs=[
            pl.BlockSpec((tS, B, D), lambda s: (s, 0, 0)),   # x tile, native layout
            pl.BlockSpec((tS, 1, D), lambda s: (s, 0, 0)),   # pe tile straight from the full table
        ],
        out_specs=pl.BlockSpec((tS, B, D), lambda s: (s, 0, 0)),
        compiler_params=pltpu.CompilerParams(
            dimension_semantics=("parallel",),               # v7x: 2 TCs split seq tiles
            vmem_limit_bytes=32 * 1024 * 1024,
        ),
        cost_estimate=cost,
        # Callers that can donate x may add input_output_aliases={0: 0} to write in place.
    )(x, pe)


if __name__ == "__main__":
    key = jax.random.PRNGKey(0)

    # Primary small test, matching the module's layout: (seq, batch, d_model).
    d_model = 32
    max_len = 5000
    seq_len = 8
    batch = 2

    k1, k2, k3 = jax.random.split(key, 3)
    x = jax.random.normal(k1, (seq_len, batch, d_model), dtype=jnp.float32)
    pe = make_positional_encoding_table(d_model, max_len)

    out = positional_encoding_forward(x, pe)
    out = jax.block_until_ready(out)

    ref = x + pe[:seq_len, :]
    assert out.shape == (seq_len, batch, d_model)
    assert out.dtype == x.dtype
    assert jnp.allclose(out, ref, atol=1e-6, rtol=1e-6)

    # Multi-tile grid path: tiny VMEM budget forces tS=8 -> grid=(5,).
    seq2, batch2 = 40, 3
    tiny_budget2 = 8 * 2 * (2 * batch2 * d_model * 4 + d_model * 4)
    x2 = jax.random.normal(k2, (seq2, batch2, d_model), dtype=jnp.float32)
    out2 = jax.block_until_ready(
        positional_encoding_forward(x2, pe, vmem_tile_budget_bytes=tiny_budget2)
    )
    ref2 = x2 + pe[:seq2, :]
    assert jnp.allclose(out2, ref2, atol=1e-6, rtol=1e-6)

    # Ragged path: seq not a multiple of the tile (tS=8, last block partial).
    seq3, batch3 = 20, 2
    tiny_budget3 = 8 * 2 * (2 * batch3 * d_model * 4 + d_model * 4)
    x3 = jax.random.normal(k3, (seq3, batch3, d_model), dtype=jnp.float32)
    out3 = jax.block_until_ready(
        positional_encoding_forward(x3, pe, vmem_tile_budget_bytes=tiny_budget3)
    )
    ref3 = x3 + pe[:seq3, :]
    assert jnp.allclose(out3, ref3, atol=1e-6, rtol=1e-6)

    print("KERNEL_OK")
</pallas_src>

<mosaic_0001>
module attributes {stable_mosaic.version = 11 : i64} {
  func.func @_pe_add_kernel(%arg0: i32, %arg1: memref<8x2x32xf32, #tpu.memory_space<vmem>>, %arg2: memref<8x1x32xf32, #tpu.memory_space<vmem>>, %arg3: memref<8x2x32xf32, #tpu.memory_space<vmem>>) attributes {dimension_semantics = [#tpu.dimension_semantics<parallel>], iteration_bounds = array<i64: 1>, scalar_prefetch = 0 : i64, scratch_operands = 0 : i64, tpu.core_type = #tpu.core_type<tc>, window_params = [{transform_indices = @transform_0, window_bounds = array<i64: 8, 2, 32>}, {transform_indices = @transform_1, window_bounds = array<i64: 8, 1, 32>}, {transform_indices = @transform_2, window_bounds = array<i64: 8, 2, 32>}]} {
    %c0 = arith.constant 0 : index
    %c0_0 = arith.constant 0 : index
    %c0_1 = arith.constant 0 : index
    %0 = vector.load %arg1[%c0, %c0_0, %c0_1] : memref<8x2x32xf32, #tpu.memory_space<vmem>>, vector<8x2x32xf32>
    %c0_2 = arith.constant 0 : index
    %c0_3 = arith.constant 0 : index
    %c0_4 = arith.constant 0 : index
    %1 = vector.load %arg2[%c0_2, %c0_3, %c0_4] : memref<8x1x32xf32, #tpu.memory_space<vmem>>, vector<8x1x32xf32>
    %2 = vector.broadcast %1 : vector<8x1x32xf32> to vector<8x2x32xf32>
    %3 = arith.addf %0, %2 : vector<8x2x32xf32>
    %c0_5 = arith.constant 0 : index
    %c0_6 = arith.constant 0 : index
    %c0_7 = arith.constant 0 : index
    %4 = vector.load %arg3[%c0_5, %c0_6, %c0_7] : memref<8x2x32xf32, #tpu.memory_space<vmem>>, vector<8x2x32xf32>
    tpu.vector_store %arg3[%c0_5, %c0_6, %c0_7], %3 {strides = array<i32>} : memref<8x2x32xf32, #tpu.memory_space<vmem>>, vector<8x2x32xf32>,
    return
  }
  func.func @transform_0(%arg0: i32) -> (i32, i32, i32) {
    %c0_i32 = arith.constant 0 : i32
    %c0_i32_0 = arith.constant 0 : i32
    %c0_i32_1 = arith.constant 0 : i32
    return %arg0, %c0_i32, %c0_i32_0 : i32, i32, i32
  }
  func.func @transform_1(%arg0: i32) -> (i32, i32, i32) {
    %c0_i32 = arith.constant 0 : i32
    %c0_i32_0 = arith.constant 0 : i32
    %c0_i32_1 = arith.constant 0 : i32
    return %arg0, %c0_i32, %c0_i32_0 : i32, i32, i32
  }
  func.func @transform_2(%arg0: i32) -> (i32, i32, i32) {
    %c0_i32 = arith.constant 0 : i32
    %c0_i32_0 = arith.constant 0 : i32
    %c0_i32_1 = arith.constant 0 : i32
    return %arg0, %c0_i32, %c0_i32_0 : i32, i32, i32
  }
}

</mosaic_0001>

<llo_original>
// kernel: tpu_custom_call.1
$region0: #{tpu_custom_call.1}
  #allocation0 [shape = 'u32[]', space=smem, size = 0x4, offset = 0x4, fixed_abs, tag = 'smem constant byte address 0x4 - core index']
  #allocation1 [shape = 'u32[144,128]{1,0:T(1,128)}', space=vmem, size = 0x12000, scoped, tag = 'internal scratch']
  %s0 = inlined_call_operand.vmem [shape: f32[8,2,32], index: 0, kind: input, shape index: {}]
  %s1 = inlined_call_operand.vmem [shape: f32[5000,1,32], index: 1, kind: input, shape index: {}]
  %s2 = inlined_call_operand.hbm [shape: f32[8,2,32], index: 2, kind: output, shape index: {}]
  %s3 = sld [smem:[#allocation0]]
  $region18: #{tpu_custom_call.1} parent=0
    _
  %s5 = ssub.s32 1, %s3
  %s6 = scalar_select 0, %s5, %s3
  $region1: #{tpu_custom_call.1} parent=0
    #allocation2 [shape = 'u8[8192]{0}', space=vmem, size = 0x2000, scoped, tag = 'output window, operand 0, single buffered']
    #allocation3 [shape = 's32[1]{0}', space=sflag, size = 0x4, scoped, tag = 'scoped memory for tpu_custom_call.1']
    %7 = vsyncpa [#allocation3], 0
    // Predicated region
    $region2: #{tpu_custom_call.1} parent=1 // pred_check
      _
    $region3: #{tpu_custom_call.1} parent=1 // pred_check_branch
      %9 = sbr.rel (0) target = $region5
    $region4: #{tpu_custom_call.1} parent=1 // pred_region
      _
    $region5: #{tpu_custom_call.1} parent=1 // pred_fallthru
      _
    // Predicated region
    $region6: #{tpu_custom_call.1} parent=1 // pred_check
      _
    $region7: #{tpu_custom_call.1} parent=1 // pred_check_branch
      %11 = sbr.rel (0) target = $region9
    $region8: #{tpu_custom_call.1} parent=1 // pred_region
      _
    $region9: #{tpu_custom_call.1} parent=1 // pred_fallthru
      _
    %v12 = vld [vmem:[%s0] sm:$0x3]
    %v13 = vld [vmem:[%s0 + $0x2] sm:$0x3]
    %v14 = vld [vmem:[%s0 + $0x4] sm:$0x3]
    %v15 = vld [vmem:[%s0 + $0x6] sm:$0x3]
    %v16 = vld [vmem:[%s0 + $0x8] sm:$0x3]
    %v17 = vld [vmem:[%s0 + $0xa] sm:$0x3]
    %v18 = vld [vmem:[%s0 + $0xc] sm:$0x3]
    %v19 = vld [vmem:[%s0 + $0xe] sm:$0x3]
    %v20 = vld [vmem:[%s1] sm:$0x1]
    %v21 = vld [vmem:[%s1 + $0x1] sm:$0x1]
    %v22 = vld [vmem:[%s1 + $0x2] sm:$0x1]
    %v23 = vld [vmem:[%s1 + $0x3] sm:$0x1]
    %v24 = vld [vmem:[%s1 + $0x4] sm:$0x1]
    %v25 = vld [vmem:[%s1 + $0x5] sm:$0x1]
    %v26 = vld [vmem:[%s1 + $0x6] sm:$0x1]
    %v27 = vld [vmem:[%s1 + $0x7] sm:$0x1]
    %v36 = vlaneseq
    %v37 = vshrl.u32 %v36, 7
    %v38 = vsub.s32 0, %v37
    %v39 = vrot.slane %v20, %v38
    %v40 = vlaneseq
    %v41 = vshrl.u32 %v40, 7
    %v42 = vsub.s32 0, %v41
    %v43 = vrot.slane %v21, %v42
    %v44 = vlaneseq
    %v45 = vshrl.u32 %v44, 7
    %v46 = vsub.s32 0, %v45
    %v47 = vrot.slane %v22, %v46
    %v48 = vlaneseq
    %v49 = vshrl.u32 %v48, 7
    %v50 = vsub.s32 0, %v49
    %v51 = vrot.slane %v23, %v50
    %v52 = vlaneseq
    %v53 = vshrl.u32 %v52, 7
    %v54 = vsub.s32 0, %v53
    %v55 = vrot.slane %v24, %v54
    %v56 = vlaneseq
    %v57 = vshrl.u32 %v56, 7
    %v58 = vsub.s32 0, %v57
    %v59 = vrot.slane %v25, %v58
    %v60 = vlaneseq
    %v61 = vshrl.u32 %v60, 7
    %v62 = vsub.s32 0, %v61
    %v63 = vrot.slane %v26, %v62
    %v64 = vlaneseq
    %v65 = vshrl.u32 %v64, 7
    %v66 = vsub.s32 0, %v65
    %v67 = vrot.slane %v27, %v66
    %v76 = vadd.f32 %v12, %v39
    %v77 = vadd.f32 %v13, %v43
    %v78 = vadd.f32 %v14, %v47
    %v79 = vadd.f32 %v15, %v51
    %v80 = vadd.f32 %v16, %v55
    %v81 = vadd.f32 %v17, %v59
    %v82 = vadd.f32 %v18, %v63
    %v83 = vadd.f32 %v19, %v67
    %vm84 = vcmask 254976
    %85 = vst.msk [vmem:[#allocation2] sm:$0x3] %vm84, %v76
    %86 = vst.msk [vmem:[#allocation2 + $0x2] sm:$0x3] %vm84, %v77
    %87 = vst.msk [vmem:[#allocation2 + $0x4] sm:$0x3] %vm84, %v78
    %88 = vst.msk [vmem:[#allocation2 + $0x6] sm:$0x3] %vm84, %v79
    %89 = vst.msk [vmem:[#allocation2 + $0x8] sm:$0x3] %vm84, %v80
    %90 = vst.msk [vmem:[#allocation2 + $0xa] sm:$0x3] %vm84, %v81
    %91 = vst.msk [vmem:[#allocation2 + $0xc] sm:$0x3] %vm84, %v82
    %92 = vst.msk [vmem:[#allocation2 + $0xe] sm:$0x3] %vm84, %v83
    // Predicated region
    $region10: #{tpu_custom_call.1} parent=1 // pred_check
      _
    $region11: #{tpu_custom_call.1} parent=1 // pred_check_branch
      %94 = sbr.rel (0) target = $region13
    $region12: #{tpu_custom_call.1} parent=1 // pred_region
      %s96 = ssub.s32 256, 256
      %97 = vsyncadd [#allocation3], %s96
      %s98 = sshll.u32 [#allocation2], 4
      %s99 = int_to_ptr.vmem [resolvable:$true] %s98
      %104 = dma.vmem_to_hbm [thread:$0]  %s99, 256, %s2, [#allocation3], 32, 32, 2
    $region13: #{tpu_custom_call.1} parent=1 // pred_fallthru
      _
    // Predicated region
    $region14: #{tpu_custom_call.1} parent=1 // pred_check
      _
    $region15: #{tpu_custom_call.1} parent=1 // pred_check_branch
      %106 = sbr.rel (0) target = $region17
    $region16: #{tpu_custom_call.1} parent=1 // pred_region
      %107 = dma.done [#allocation3], 256
    $region17: #{tpu_custom_call.1} parent=1 // pred_fallthru
      _
    %108 = vsyncpa [#allocation3], 1

</llo_original>
